<compile_context>
chip_gen: v5e
topology: v5e:2x2
jax: 0.10.0
libtpu: 0.0.40
codegen_flags: <defaults>
</compile_context>

<pallas_src>
import functools

import jax
import jax.numpy as jnp
from jax.experimental import pallas as pl
from jax.experimental.pallas import tpu as pltpu


def _se_kernel(x_ref, w1t_ref, w2_ref, o_ref, *, hw, inv_hw):
    # x_ref / o_ref: (Bt, C, HW) slab covering Bt batch elements.
    # w1t_ref: (C, Cr) = fc1 weight transposed; w2_ref: (C, Cr) = fc2 weight.
    x = x_ref[...]

    # Global average pool over spatial (lane-axis reduction), accumulated in
    # f32.  Tail lanes beyond HW (when HW % 128 != 0) are masked out explicitly
    # so whatever garbage lives in the physical padding never reaches the sum.
    lane = jax.lax.broadcasted_iota(jnp.int32, x.shape, dimension=2)
    xm = jnp.where(lane < hw, x.astype(jnp.float32), 0.0)
    y = jnp.sum(xm, axis=-1, keepdims=True) * inv_hw              # (Bt, C, 1)

    # The gate MLP is tiny (<1% MXU utilization), so it stays on the VPU/XLU
    # as broadcast-multiply + reduce instead of jnp.dot.
    # fc1 (no bias) + ReLU:    h[b, r] = sum_c y[b, c] * W1[r, c]
    h = jnp.sum(y * w1t_ref[...], axis=1, keepdims=True)          # (Bt, 1, Cr)
    h = jnp.maximum(h, 0.0)
    # fc2 (no bias) + sigmoid: s[b, c] = sum_r W2[c, r] * h[b, r]
    s = jax.nn.sigmoid(jnp.sum(w2_ref[...] * h, axis=-1, keepdims=True))  # (Bt, C, 1)

    # Scale the slab by the per-(batch, channel) gate; apply in f32 and cast
    # once so low-precision inputs don't lose gate precision.
    o_ref[...] = (x_ref[...].astype(jnp.float32) * s).astype(o_ref.dtype)


def _vmem_budget_bytes():
    # ~85% of per-core VMEM: v5e/v6e -> ~109 MiB, v7x -> ~54 MiB.  Leaves
    # headroom for Mosaic internal scratch / semaphores instead of clamping
    # at exactly the physical size.
    try:
        cap = int(pltpu.get_tpu_info().vmem_capacity_bytes)
    except Exception:
        cap = 64 << 20  # conservative default (v7x-sized per-TC VMEM)
    return int(cap * 0.85)


def _pick_batch_tile(B, slab_bytes, weight_bytes, budget_bytes):
    """Largest divisor of B such that one block stays ~2 MiB, four double-
    buffered blocks (+ resident weights) fit the VMEM budget, and >= min(B, 8)
    grid steps remain so both TensorCores / the pipeline stay busy."""
    target = 2 << 20
    best = 1
    for d in range(1, B + 1):
        if B % d != 0:
            continue
        if B // d < min(B, 8):
            break
        if d > 1 and d * slab_bytes > target:
            break
        if 4 * d * slab_bytes + 2 * weight_bytes > budget_bytes:
            break
        best = d
    return best


def channel_attention(x_nchw, w1, w2):
    """SE / ChannelAttention forward.
    x_nchw: (B, C, H, W)
    w1: PyTorch fc1 weight, shape (C//r, C)
    w2: PyTorch fc2 weight, shape (C, C//r)
    """
    B, C, H, W = x_nchw.shape
    HW = H * W
    Cr = w1.shape[0]

    # Contiguous reshape only — no padding, no trailing slice.
    x_flat = x_nchw.reshape(B, C, HW)
    w1t = w1.T  # (C, Cr): contract over the sublane (C) axis in-kernel.
    w2k = w2    # (C, Cr): PyTorch layout used directly.

    itemsize = jnp.dtype(x_flat.dtype).itemsize
    w_item = jnp.dtype(w1.dtype).itemsize
    # Physical (tile-padded) VMEM footprint of one batch element's slab.
    c_pad = -(-C // 8) * 8
    hw_pad = -(-HW // 128) * 128
    slab_phys = c_pad * hw_pad * itemsize
    weight_phys = 2 * c_pad * max(128, -(-Cr // 128) * 128) * w_item

    budget = _vmem_budget_bytes()
    bt = _pick_batch_tile(B, slab_phys, weight_phys, budget)
    grid_steps = B // bt
    # TODO(synk): if a single (C, HW) slab alone exceeds the budget (very large
    # feature maps), switch to a two-pass design: tiled pooled sums, gate MLP in
    # plain JAX, then a tiled scale kernel with the (B, C) gate kept resident.

    vmem_limit = 4 * bt * slab_phys + 2 * weight_phys + (4 << 20)
    vmem_limit = int(min(max(vmem_limit, 16 << 20), budget))

    kernel = functools.partial(_se_kernel, hw=HW, inv_hw=1.0 / float(HW))

    cost = pl.CostEstimate(
        flops=int(2 * B * C * HW + 4 * B * C * Cr),
        transcendentals=int(B * C),
        bytes_accessed=int(2 * B * C * HW * itemsize + 2 * C * Cr * w_item),
    )

    out_flat = pl.pallas_call(
        kernel,
        out_shape=jax.ShapeDtypeStruct((B, C, HW), x_flat.dtype),
        grid=(grid_steps,),
        in_specs=[
            # Bt batch elements per grid step; C and HW are full extents
            # (exempt from the (8, 128) rule) so ragged HW needs no padding.
            pl.BlockSpec((bt, C, HW), lambda b: (b, 0, 0)),
            # Weights: constant index_map -> resident across grid steps.
            pl.BlockSpec((C, Cr), lambda b: (0, 0)),
            pl.BlockSpec((C, Cr), lambda b: (0, 0)),
        ],
        out_specs=pl.BlockSpec((bt, C, HW), lambda b: (b, 0, 0)),
        compiler_params=pltpu.CompilerParams(
            dimension_semantics=("parallel",),   # megacore sharding over batch blocks
            vmem_limit_bytes=vmem_limit,
        ),
        cost_estimate=cost,
    )(x_flat, w1t, w2k)

    return out_flat.reshape(B, C, H, W)


def _reference(x, w1, w2):
    y = jnp.mean(x, axis=(2, 3))                      # (B, C)
    h = jnp.maximum(y @ w1.T, 0.0)                    # (B, Cr)
    s = jax.nn.sigmoid(h @ w2.T)                      # (B, C)
    return x * s[:, :, None, None]


if __name__ == "__main__":
    # Check 1: the module's natural small shape (HW = 256, lane-aligned).
    B, C, H, W, r = 2, 32, 16, 16, 16
    Cr = C // r  # 2
    kx, k1, k2 = jax.random.split(jax.random.PRNGKey(0), 3)
    x = jax.random.normal(kx, (B, C, H, W), dtype=jnp.float32)
    # PyTorch Linear weight shapes: (out_features, in_features).
    w1 = 0.1 * jax.random.normal(k1, (Cr, C), dtype=jnp.float32)
    w2 = 0.1 * jax.random.normal(k2, (C, Cr), dtype=jnp.float32)
    out = jax.block_until_ready(channel_attention(x, w1, w2))
    ref = _reference(x, w1, w2)
    assert out.shape == (B, C, H, W)
    assert jnp.allclose(out, ref, atol=1e-5, rtol=1e-5)

    # Check 2: ragged spatial (HW = 49) — exercises the un-padded full-extent
    # last block dim and the masked pooled reduction.
    B2, C2, H2, W2, r2 = 2, 16, 7, 7, 4
    Cr2 = C2 // r2
    k3, k4, k5 = jax.random.split(jax.random.PRNGKey(1), 3)
    x2 = jax.random.normal(k3, (B2, C2, H2, W2), dtype=jnp.float32)
    w1b = 0.1 * jax.random.normal(k4, (Cr2, C2), dtype=jnp.float32)
    w2b = 0.1 * jax.random.normal(k5, (C2, Cr2), dtype=jnp.float32)
    out2 = jax.block_until_ready(channel_attention(x2, w1b, w2b))
    assert jnp.allclose(out2, _reference(x2, w1b, w2b), atol=1e-5, rtol=1e-5)

    # Check 3: batch folding (Bt > 1 per grid step) with ragged spatial.
    B3, C3, H3, W3, r3 = 16, 16, 7, 7, 4
    Cr3 = C3 // r3
    k6, k7, k8 = jax.random.split(jax.random.PRNGKey(2), 3)
    x3 = jax.random.normal(k6, (B3, C3, H3, W3), dtype=jnp.float32)
    w1c = 0.1 * jax.random.normal(k7, (Cr3, C3), dtype=jnp.float32)
    w2c = 0.1 * jax.random.normal(k8, (C3, Cr3), dtype=jnp.float32)
    out3 = jax.block_until_ready(channel_attention(x3, w1c, w2c))
    assert jnp.allclose(out3, _reference(x3, w1c, w2c), atol=1e-5, rtol=1e-5)

    print("KERNEL_OK")
</pallas_src>

<mosaic_0001>
module attributes {stable_mosaic.version = 11 : i64} {
  func.func @_se_kernel(%arg0: i32, %arg1: memref<1x32x256xf32, #tpu.memory_space<vmem>>, %arg2: memref<32x2xf32, #tpu.memory_space<vmem>>, %arg3: memref<32x2xf32, #tpu.memory_space<vmem>>, %arg4: memref<1x32x256xf32, #tpu.memory_space<vmem>>) attributes {dimension_semantics = [#tpu.dimension_semantics<parallel>], iteration_bounds = array<i64: 2>, scalar_prefetch = 0 : i64, scratch_operands = 0 : i64, tpu.core_type = #tpu.core_type<tc>, window_params = [{transform_indices = @transform_0, window_bounds = array<i64: 1, 32, 256>}, {pipeline_mode = #tpu.pipeline_mode<synchronous>, transform_indices = @transform_1, window_bounds = array<i64: 32, 2>}, {pipeline_mode = #tpu.pipeline_mode<synchronous>, transform_indices = @transform_2, window_bounds = array<i64: 32, 2>}, {transform_indices = @transform_3, window_bounds = array<i64: 1, 32, 256>}]} {
    %c0 = arith.constant 0 : index
    %c0_0 = arith.constant 0 : index
    %c0_1 = arith.constant 0 : index
    %0 = vector.load %arg1[%c0, %c0_0, %c0_1] : memref<1x32x256xf32, #tpu.memory_space<vmem>>, vector<1x32x256xf32>
    %1 = tpu.iota {dimensions = array<i32: 2>} : vector<1x32x256xi32>
    %c256_i32 = arith.constant 256 : i32
    %2 = vector.broadcast %c256_i32 : i32 to vector<1x32x256xi32>
    %3 = arith.cmpi slt, %1, %2 : vector<1x32x256xi32>
    %cst = arith.constant 0.000000e+00 : f32
    %4 = vector.broadcast %cst : f32 to vector<1x32x256xf32>
    %5 = arith.select %3, %0, %4 : vector<1x32x256xi1>, vector<1x32x256xf32>
    %cst_2 = arith.constant dense<0.000000e+00> : vector<1x32xf32>
    %6 = vector.multi_reduction <add>, %5, %cst_2 [2] : vector<1x32x256xf32> to vector<1x32xf32>
    %7 = vector.shape_cast %6 : vector<1x32xf32> to vector<1x32x1xf32>
    %cst_3 = arith.constant 3.906250e-03 : f32
    %8 = vector.broadcast %cst_3 : f32 to vector<1x32x1xf32>
    %9 = arith.mulf %7, %8 : vector<1x32x1xf32>
    %c0_4 = arith.constant 0 : index
    %c0_5 = arith.constant 0 : index
    %10 = vector.load %arg2[%c0_4, %c0_5] : memref<32x2xf32, #tpu.memory_space<vmem>>, vector<32x2xf32>
    %11 = vector.shape_cast %10 : vector<32x2xf32> to vector<1x32x2xf32>
    %12 = vector.broadcast %9 : vector<1x32x1xf32> to vector<1x32x2xf32>
    %13 = arith.mulf %12, %11 : vector<1x32x2xf32>
    %cst_6 = arith.constant dense<0.000000e+00> : vector<1x2xf32>
    %14 = vector.multi_reduction <add>, %13, %cst_6 [1] : vector<1x32x2xf32> to vector<1x2xf32>
    %15 = vector.shape_cast %14 : vector<1x2xf32> to vector<1x1x2xf32>
    %cst_7 = arith.constant 0.000000e+00 : f32
    %16 = vector.broadcast %cst_7 : f32 to vector<1x1x2xf32>
    %17 = arith.maximumf %15, %16 : vector<1x1x2xf32>
    %c0_8 = arith.constant 0 : index
    %c0_9 = arith.constant 0 : index
    %18 = vector.load %arg3[%c0_8, %c0_9] : memref<32x2xf32, #tpu.memory_space<vmem>>, vector<32x2xf32>
    %19 = vector.shape_cast %18 : vector<32x2xf32> to vector<1x32x2xf32>
    %20 = vector.broadcast %17 : vector<1x1x2xf32> to vector<1x32x2xf32>
    %21 = arith.mulf %19, %20 : vector<1x32x2xf32>
    %cst_10 = arith.constant dense<0.000000e+00> : vector<1x32xf32>
    %22 = vector.multi_reduction <add>, %21, %cst_10 [2] : vector<1x32x2xf32> to vector<1x32xf32>
    %23 = vector.shape_cast %22 : vector<1x32xf32> to vector<1x32x1xf32>
    %24 = arith.negf %23 : vector<1x32x1xf32>
    %25 = math.exp %24 : vector<1x32x1xf32>
    %cst_11 = arith.constant 1.000000e+00 : f32
    %26 = vector.broadcast %cst_11 : f32 to vector<1x32x1xf32>
    %27 = arith.addf %26, %25 : vector<1x32x1xf32>
    %28 = arith.divf %26, %27 : vector<1x32x1xf32>
    %c0_12 = arith.constant 0 : index
    %c0_13 = arith.constant 0 : index
    %c0_14 = arith.constant 0 : index
    %29 = vector.load %arg1[%c0_12, %c0_13, %c0_14] : memref<1x32x256xf32, #tpu.memory_space<vmem>>, vector<1x32x256xf32>
    %30 = vector.broadcast %28 : vector<1x32x1xf32> to vector<1x32x256xf32>
    %31 = arith.mulf %29, %30 : vector<1x32x256xf32>
    %c0_15 = arith.constant 0 : index
    %c0_16 = arith.constant 0 : index
    %c0_17 = arith.constant 0 : index
    %32 = vector.load %arg4[%c0_15, %c0_16, %c0_17] : memref<1x32x256xf32, #tpu.memory_space<vmem>>, vector<1x32x256xf32>
    tpu.vector_store %arg4[%c0_15, %c0_16, %c0_17], %31 {strides = array<i32>} : memref<1x32x256xf32, #tpu.memory_space<vmem>>, vector<1x32x256xf32>,
    return
  }
  func.func @transform_0(%arg0: i32) -> (i32, i32, i32) {
    %c0_i32 = arith.constant 0 : i32
    %c0_i32_0 = arith.constant 0 : i32
    %c0_i32_1 = arith.constant 0 : i32
    return %arg0, %c0_i32, %c0_i32_0 : i32, i32, i32
  }
  func.func @transform_1(%arg0: i32) -> (i32, i32) {
    %c0_i32 = arith.constant 0 : i32
    %c0_i32_0 = arith.constant 0 : i32
    %c0_i32_1 = arith.constant 0 : i32
    return %c0_i32, %c0_i32_0 : i32, i32
  }
  func.func @transform_2(%arg0: i32) -> (i32, i32) {
    %c0_i32 = arith.constant 0 : i32
    %c0_i32_0 = arith.constant 0 : i32
    %c0_i32_1 = arith.constant 0 : i32
    return %c0_i32, %c0_i32_0 : i32, i32
  }
  func.func @transform_3(%arg0: i32) -> (i32, i32, i32) {
    %c0_i32 = arith.constant 0 : i32
    %c0_i32_0 = arith.constant 0 : i32
    %c0_i32_1 = arith.constant 0 : i32
    return %arg0, %c0_i32, %c0_i32_0 : i32, i32, i32
  }
}

</mosaic_0001>

<llo_original>
// kernel: tpu_custom_call.1
$region0: #{tpu_custom_call.1}
  #allocation0 [shape = 'u32[]', space=smem, size = 0x4, offset = 0x4, fixed_abs, tag = 'smem constant byte address 0x4 - core index']
  #allocation1 [shape = 'u32[72,128]{1,0:T(1,128)}', space=vmem, size = 0x9000, scoped, tag = 'internal scratch']
  %s0 = inlined_call_operand.hbm [shape: f32[2,32,256], index: 0, kind: input, shape index: {}]
  %s1 = inlined_call_operand.vmem [shape: f32[32,2], index: 1, kind: input, shape index: {}]
  %s2 = inlined_call_operand.vmem [shape: f32[32,2], index: 2, kind: input, shape index: {}]
  %s3 = inlined_call_operand.hbm [shape: f32[2,32,256], index: 3, kind: output, shape index: {}]
  %s4 = sld [smem:[#allocation0]]
  $region49: #{tpu_custom_call.1} parent=0
    _
  %s6 = ssub.s32 1, %s4
  %s7 = scalar_select 0, %s6, %s4
  $region1: #{tpu_custom_call.1} parent=0
    #allocation2 [shape = 'u8[65536]{0}', space=vmem, size = 0x10000, scoped, tag = 'input window, operand 0']
    #allocation3 [shape = 's32[2]{0}', space=sflag, size = 0x8, scoped, tag = 'scoped memory for tpu_custom_call.1']
    #allocation4 [shape = 's32[2]{0}', space=sflag, size = 0x8, scoped, tag = 'scoped memory for tpu_custom_call.1']
    #allocation5 [shape = 'u8[65536]{0}', space=vmem, size = 0x10000, scoped, tag = 'output window, operand 0']
    %8 = vsyncpa [#allocation3], 0
    %s9 = scalar_lea.sflag [#allocation3], 1
    %10 = vsyncpa %s9, 0
    %11 = vsyncpa [#allocation4], 0
    %s12 = scalar_lea.sflag [#allocation4], 1
    %13 = vsyncpa %s12, 0
    loop: start=0, step=1, limit=4
    $region2: #{tpu_custom_call.1} parent=1 // loop_pre_header
      _
    $region3: #{tpu_custom_call.1} parent=1 // loop_header
      %s15 = sphi 0, %s19
      %p16 = scmp.ge.s32.totalorder %s15, 4
      %s25 = sphi 0, %s27
      %s28 = sphi 0, %s25
      %s29 = sphi 0, %s28
      %s45 = sphi 0, %s29
      %s49 = sphi 0, %s49
      %s51 = sphi 0, %s49
      %s52 = sphi 0, %s51
      %s66 = sphi 0, %s52
      %s70 = sphi 0, %s70
      %s72 = sphi 0, %s70
      %s73 = sphi 0, %s72
      %s87 = sphi 0, %s73
      %s93 = sphi 0, %s95
      %s96 = sphi 0, %s93
      %s97 = sphi 0, %s96
      %s113 = sphi 0, %s97
    $region4: #{tpu_custom_call.1} parent=1 // loop_header_branch
      %18 = sbr.rel (%p16) target = $region8
    $region5: #{tpu_custom_call.1} parent=1 // loop_body
      %s20 = ssub.s32 %s15, 1
      %s21 = ssub.s32 %s15, 2
      %s22 = sadd.s32 %s15, 1
      %s23 = ssub.s32 %s15, %s22
      %p24 = scmp.eq.s32.totalorder %s23, 0
      %s26 = sadd.s32 %s25, 1
      %s27 = scalar_select %p24, %s25, %s26
      %p30 = pneg %p24
      %p31 = scmp.eq.s32.totalorder %s15, 1
      %p32 = por %p30, %p31
      %p33 = scmp.ne.s32.totalorder %s25, %s28
      %p34 = scmp.eq.s32.totalorder %s15, 0
      %p35 = por %p33, %p34
      %p36 = scmp.ne.s32.totalorder %s25, %s28
      %p37 = scmp.eq.s32.totalorder %s20, 1
      %p38 = por %p36, %p37
      %p39 = scmp.ne.s32.totalorder %s28, %s29
      %p40 = scmp.eq.s32.totalorder %s20, 0
      %p41 = por %p39, %p40
      %p42 = scmp.ne.s32.totalorder %s28, %s29
      %p43 = scmp.eq.s32.totalorder %s21, 1
      %p44 = por %p42, %p43
      %p46 = scmp.ne.s32.totalorder %s29, %s45
      %p47 = scmp.eq.s32.totalorder %s21, 0
      %p48 = por %p46, %p47
      %s50 = sadd.s32 %s49, 1
      %p53 = scmp.eq.s32.totalorder %s15, 1
      %p54 = scmp.ne.s32.totalorder %s49, %s51
      %p55 = scmp.eq.s32.totalorder %s15, 0
      %p56 = por %p54, %p55
      %p57 = scmp.ne.s32.totalorder %s49, %s51
      %p58 = scmp.eq.s32.totalorder %s20, 1
      %p59 = por %p57, %p58
      %p60 = scmp.ne.s32.totalorder %s51, %s52
      %p61 = scmp.eq.s32.totalorder %s20, 0
      %p62 = por %p60, %p61
      %p63 = scmp.ne.s32.totalorder %s51, %s52
      %p64 = scmp.eq.s32.totalorder %s21, 1
      %p65 = por %p63, %p64
      %p67 = scmp.ne.s32.totalorder %s52, %s66
      %p68 = scmp.eq.s32.totalorder %s21, 0
      %p69 = por %p67, %p68
      %s71 = sadd.s32 %s70, 1
      %p74 = scmp.eq.s32.totalorder %s15, 1
      %p75 = scmp.ne.s32.totalorder %s70, %s72
      %p76 = scmp.eq.s32.totalorder %s15, 0
      %p77 = por %p75, %p76
      %p78 = scmp.ne.s32.totalorder %s70, %s72
      %p79 = scmp.eq.s32.totalorder %s20, 1
      %p80 = por %p78, %p79
      %p81 = scmp.ne.s32.totalorder %s72, %s73
      %p82 = scmp.eq.s32.totalorder %s20, 0
      %p83 = por %p81, %p82
      %p84 = scmp.ne.s32.totalorder %s72, %s73
      %p85 = scmp.eq.s32.totalorder %s21, 1
      %p86 = por %p84, %p85
      %p88 = scmp.ne.s32.totalorder %s73, %s87
      %p89 = scmp.eq.s32.totalorder %s21, 0
      %p90 = por %p88, %p89
      %s91 = ssub.s32 %s15, %s22
      %p92 = scmp.eq.s32.totalorder %s91, 0
      %s94 = sadd.s32 %s93, 1
      %s95 = scalar_select %p92, %s93, %s94
      %p98 = pneg %p92
      %p99 = scmp.eq.s32.totalorder %s15, 1
      %p100 = por %p98, %p99
      %p101 = scmp.ne.s32.totalorder %s93, %s96
      %p102 = scmp.eq.s32.totalorder %s15, 0
      %p103 = por %p101, %p102
      %p104 = scmp.ne.s32.totalorder %s93, %s96
      %p105 = scmp.eq.s32.totalorder %s20, 1
      %p106 = por %p104, %p105
      %p107 = scmp.ne.s32.totalorder %s96, %s97
      %p108 = scmp.eq.s32.totalorder %s20, 0
      %p109 = por %p107, %p108
      %p110 = scmp.ne.s32.totalorder %s96, %s97
      %p111 = scmp.eq.s32.totalorder %s21, 1
      %p112 = por %p110, %p111
      %p114 = scmp.ne.s32.totalorder %s97, %s113
      %p115 = scmp.eq.s32.totalorder %s21, 0
      %p116 = por %p114, %p115
      %p117 = scmp.le.s32.totalorder 1, %s15
      %p118 = scmp.lt.s32.totalorder %s15, 3
      %p119 = pnand %p117, %p118
      %p120 = pneg %p119
      // Predicated region
      $region9: #{tpu_custom_call.1} parent=5 // pred_check
        _
      $region10: #{tpu_custom_call.1} parent=5 // pred_check_branch
        %122 = sbr.rel (%p119) target = $region12
      $region11: #{tpu_custom_call.1} parent=5 // pred_region
        %s123 = ssub.s32 %s15, 1
        // Predicated region
        $region13: #{tpu_custom_call.1} parent=11 // pred_check
          %p124 = pneg %p62
        $region14: #{tpu_custom_call.1} parent=11 // pred_check_branch
          %126 = sbr.rel (%p124) target = $region16
        $region15: #{tpu_custom_call.1} parent=11 // pred_region
          _
        $region16: #{tpu_custom_call.1} parent=11 // pred_fallthru
          _
        // Predicated region
        $region17: #{tpu_custom_call.1} parent=11 // pred_check
          %p127 = pneg %p83
        $region18: #{tpu_custom_call.1} parent=11 // pred_check_branch
          %129 = sbr.rel (%p127) target = $region20
        $region19: #{tpu_custom_call.1} parent=11 // pred_region
          _
        $region20: #{tpu_custom_call.1} parent=11 // pred_fallthru
          _
      $region12: #{tpu_custom_call.1} parent=5 // pred_fallthru
        _
      %p130 = scmp.lt.s32.totalorder %s15, 2
      // Predicated region
      $region21: #{tpu_custom_call.1} parent=5 // pred_check
        %p131 = pneg %p130
      $region22: #{tpu_custom_call.1} parent=5 // pred_check_branch
        %133 = sbr.rel (%p131) target = $region24
      $region23: #{tpu_custom_call.1} parent=5 // pred_region
        // Predicated region
        $region25: #{tpu_custom_call.1} parent=23 // pred_check
          %p134 = pneg %p35
        $region26: #{tpu_custom_call.1} parent=23 // pred_check_branch
          %136 = sbr.rel (%p134) target = $region28
        $region27: #{tpu_custom_call.1} parent=23 // pred_region
          %s137 = sand.u32 %s25, 1
          %s138 = scalar_lea.sflag [#allocation3], %s137
          %s139 = sand.u32 %s25, 1
          %s140 = smul.addr %s139, 64
          %s141 = scalar_lea.vmem [#allocation2], %s140
          %143 = vsyncadd %s138, 0
          %s144 = smul.addr %s15, 8
          %s145 = smul.addr %s144, 8
          %s146 = scalar_lea.hbm %s0, %s145
          %s147 = sshll.u32 %s146, 4
          %s148 = int_to_ptr.hbm [resolvable:$true] %s147
          %s149 = sshll.u32 %s141, 4
          %s150 = int_to_ptr.vmem [resolvable:$true] %s149
          %155 = dma.hbm_to_vmem [thread:$0]  %s148, 1024, %s150, %s138, 256, 256, 16
        $region28: #{tpu_custom_call.1} parent=23 // pred_fallthru
          _
      $region24: #{tpu_custom_call.1} parent=5 // pred_fallthru
        _
      %p156 = scmp.le.s32.totalorder 1, %s15
      %p157 = scmp.lt.s32.totalorder %s15, 3
      %p158 = pnand %p156, %p157
      %p159 = pneg %p158
      // Predicated region
      $region29: #{tpu_custom_call.1} parent=5 // pred_check
        _
      $region30: #{tpu_custom_call.1} parent=5 // pred_check_branch
        %161 = sbr.rel (%p158) target = $region32
      $region31: #{tpu_custom_call.1} parent=5 // pred_region
        %s162 = ssub.s32 %s15, 1
        %s163 = sand.u32 %s28, 1
        %s164 = scalar_lea.sflag [#allocation3], %s163
        %s165 = sand.u32 %s28, 1
        %s166 = smul.addr %s165, 64
        %s167 = scalar_lea.vmem [#allocation2], %s166
        // Predicated region
        $region33: #{tpu_custom_call.1} parent=31 // pred_check
          %p168 = pneg %p41
        $region34: #{tpu_custom_call.1} parent=31 // pred_check_branch
          %170 = sbr.rel (%p168) target = $region36
        $region35: #{tpu_custom_call.1} parent=31 // pred_region
          %172 = dma.done %s164, 1024
        $region36: #{tpu_custom_call.1} parent=31 // pred_fallthru
          _
        %s173 = sand.u32 %s28, 1
        %s174 = scalar_lea.sflag [#allocation3], %s173
        %s175 = sand.u32 %s28, 1
        %s176 = smul.addr %s175, 64
        %s177 = scalar_lea.vmem [#allocation2], %s176
        %p178 = pneg %p41
        %p179 = pneg %p38
        %p180 = pneg %p62
        %p181 = pneg %p59
        %p182 = pneg %p83
        %p183 = pneg %p80
        %p184 = pneg %p109
        %p185 = pneg %p106
        %s186 = sand.u32 %s96, 1
        %s187 = scalar_lea.sflag [#allocation4], %s186
        %s188 = sand.u32 %s96, 1
        %s189 = smul.addr %s188, 64
        %s190 = scalar_lea.vmem [#allocation5], %s189
        %v191 = vld [vmem:[%s167] sm:$0xff]
        %v192 = vld [vmem:[%s167 + $0x8] sm:$0xff]
        %v193 = vld [vmem:[%s167 + $0x10] sm:$0xff]
        %v194 = vld [vmem:[%s167 + $0x18] sm:$0xff]
        %v195 = vld [vmem:[%s167 + $0x20] sm:$0xff]
        %v196 = vld [vmem:[%s167 + $0x28] sm:$0xff]
        %v197 = vld [vmem:[%s167 + $0x30] sm:$0xff]
        %v198 = vld [vmem:[%s167 + $0x38] sm:$0xff]
        %v199 = vlaneseq
        %v200 = vand.u32 %v199, 127
        %v201 = vadd.s32 %v200, 128
        %vm202 = vcmp.lt.s32.totalorder %v200, 256
        %vm203 = vcmp.lt.s32.totalorder %v201, 256
        %v204 = vsel %vm202, %v191, 0.0
        %v205 = vsel %vm203, %v192, 0.0
        %v206 = vsel %vm202, %v193, 0.0
        %v207 = vsel %vm203, %v194, 0.0
        %v208 = vsel %vm202, %v195, 0.0
        %v209 = vsel %vm203, %v196, 0.0
        %v210 = vsel %vm202, %v197, 0.0
        %v211 = vsel %vm203, %v198, 0.0
        %v212 = vadd.f32 %v204, %v205
        %213 = vadd.xlane.f32.xlu0 %v212
        %v214 = vpop.xlane.xlu0 %213
        %v215 = vadd.f32 %v206, %v207
        %216 = vadd.xlane.f32.xlu0 %v215
        %v217 = vpop.xlane.xlu0 %216
        %v218 = vadd.f32 %v208, %v209
        %219 = vadd.xlane.f32.xlu0 %v218
        %v220 = vpop.xlane.xlu0 %219
        %v221 = vadd.f32 %v210, %v211
        %222 = vadd.xlane.f32.xlu0 %v221
        %v223 = vpop.xlane.xlu0 %222
        %v224 = vmul.f32 %v214, 0.00390625
        %v225 = vmul.f32 %v217, 0.00390625
        %v226 = vmul.f32 %v220, 0.00390625
        %v227 = vmul.f32 %v223, 0.00390625
        %v228 = vld [vmem:[%s1] sm:$0xff]
        %v229 = vld [vmem:[%s1 + $0x8] sm:$0xff]
        %v230 = vld [vmem:[%s1 + $0x10] sm:$0xff]
        %v231 = vld [vmem:[%s1 + $0x18] sm:$0xff]
        %v232 = vmul.f32 %v224, %v228
        %v233 = vmul.f32 %v225, %v229
        %v234 = vmul.f32 %v226, %v230
        %v235 = vmul.f32 %v227, %v231
        %vm236 = vcmask 15360
        %v237 = vsel %vm236, %v232, 0.0
        %v238 = vsel %vm236, %v233, 0.0
        %v239 = vadd.f32 %v237, %v238
        %v240 = vsel %vm236, %v234, 0.0
        %v241 = vadd.f32 %v239, %v240
        %v242 = vsel %vm236, %v235, 0.0
        %v243 = vadd.f32 %v241, %v242
        %v244 = vrot.slane %v243, 4
        %v245 = vadd.f32 %v243, %v244
        %v246 = vrot.slane %v245, 2
        %v247 = vadd.f32 %v245, %v246
        %v248 = vrot.slane %v247, 1
        %v249 = vadd.f32 %v247, %v248
        %v250 = vmax.f32 %v249, 0.0
        %v251 = vld [vmem:[%s2] sm:$0xff]
        %v252 = vld [vmem:[%s2 + $0x8] sm:$0xff]
        %v253 = vld [vmem:[%s2 + $0x10] sm:$0xff]
        %v254 = vld [vmem:[%s2 + $0x18] sm:$0xff]
        %v255 = vmul.f32 %v251, %v250
        %v256 = vmul.f32 %v252, %v250
        %v257 = vmul.f32 %v253, %v250
        %v258 = vmul.f32 %v254, %v250
        %v259 = vsel %vm236, %v255, 0.0
        %260 = vadd.xlane.f32.xlu0 %v259
        %v261 = vpop.xlane.xlu0 %260
        %v262 = vsel %vm236, %v256, 0.0
        %263 = vadd.xlane.f32.xlu0 %v262
        %v264 = vpop.xlane.xlu0 %263
        %v265 = vsel %vm236, %v257, 0.0
        %266 = vadd.xlane.f32.xlu0 %v265
        %v267 = vpop.xlane.xlu0 %266
        %v268 = vsel %vm236, %v258, 0.0
        %269 = vadd.xlane.f32.xlu0 %v268
        %v270 = vpop.xlane.xlu0 %269
        %v271 = vxor.u32 %v261, 2147483648
        %v272 = vxor.u32 %v264, 2147483648
        %v273 = vxor.u32 %v267, 2147483648
        %v274 = vxor.u32 %v270, 2147483648
        %v275 = vmul.f32 %v271, 1.442695
        %v276 = vpow.pop %v275
        %v277 = vmul.f32 %v272, 1.442695
        %v278 = vpow.pop %v277
        %v279 = vmul.f32 %v273, 1.442695
        %v280 = vpow.pop %v279
        %v281 = vmul.f32 %v274, 1.442695
        %v282 = vpow.pop %v281
        %v283 = vadd.f32 %v276, 1.0
        %v284 = vadd.f32 %v278, 1.0
        %v285 = vadd.f32 %v280, 1.0
        %v286 = vadd.f32 %v282, 1.0
        %v287 = vrcp.pop %v283
        %v288 = vmul.f32 %v283, %v287
        %v289 = vsub.f32 1.0, %v288
        %v290 = vmul.f32 %v287, %v289
        %v291 = vadd.f32 %v287, %v290
        %vm292 = vweird.f32 %v283
        %vm293 = vweird.f32 %v287
        %vm294 = vmor %vm292, %vm293
        %v295 = vsel %vm294, %v287, %v291
        %v296 = vand.u32 2147483647, %v283
        %vm297 = vcmp.eq.f32.partialorder %v296, 8.507059e+37
        %v298 = vand.u32 %v283, 2147483648
        %v299 = vor.u32 1.1754944e-38, %v298
        %v300 = vsel %vm297, %v299, %v295
        %v301 = vmul.f32 1.0, %v300
        %v302 = vrcp.pop %v284
        %v303 = vmul.f32 %v284, %v302
        %v304 = vsub.f32 1.0, %v303
        %v305 = vmul.f32 %v302, %v304
        %v306 = vadd.f32 %v302, %v305
        %vm307 = vweird.f32 %v284
        %vm308 = vweird.f32 %v302
        %vm309 = vmor %vm307, %vm308
        %v310 = vsel %vm309, %v302, %v306
        %v311 = vand.u32 2147483647, %v284
        %vm312 = vcmp.eq.f32.partialorder %v311, 8.507059e+37
        %v313 = vand.u32 %v284, 2147483648
        %v314 = vor.u32 1.1754944e-38, %v313
        %v315 = vsel %vm312, %v314, %v310
        %v316 = vmul.f32 1.0, %v315
        %v317 = vrcp.pop %v285
        %v318 = vmul.f32 %v285, %v317
        %v319 = vsub.f32 1.0, %v318
        %v320 = vmul.f32 %v317, %v319
        %v321 = vadd.f32 %v317, %v320
        %vm322 = vweird.f32 %v285
        %vm323 = vweird.f32 %v317
        %vm324 = vmor %vm322, %vm323
        %v325 = vsel %vm324, %v317, %v321
        %v326 = vand.u32 2147483647, %v285
        %vm327 = vcmp.eq.f32.partialorder %v326, 8.507059e+37
        %v328 = vand.u32 %v285, 2147483648
        %v329 = vor.u32 1.1754944e-38, %v328
        %v330 = vsel %vm327, %v329, %v325
        %v331 = vmul.f32 1.0, %v330
        %v332 = vrcp.pop %v286
        %v333 = vmul.f32 %v286, %v332
        %v334 = vsub.f32 1.0, %v333
        %v335 = vmul.f32 %v332, %v334
        %v336 = vadd.f32 %v332, %v335
        %vm337 = vweird.f32 %v286
        %vm338 = vweird.f32 %v332
        %vm339 = vmor %vm337, %vm338
        %v340 = vsel %vm339, %v332, %v336
        %v341 = vand.u32 2147483647, %v286
        %vm342 = vcmp.eq.f32.partialorder %v341, 8.507059e+37
        %v343 = vand.u32 %v286, 2147483648
        %v344 = vor.u32 1.1754944e-38, %v343
        %v345 = vsel %vm342, %v344, %v340
        %v346 = vmul.f32 1.0, %v345
        %v347 = vmul.f32 %v191, %v301
        %v348 = vmul.f32 %v192, %v301
        %v349 = vmul.f32 %v193, %v316
        %v350 = vmul.f32 %v194, %v316
        %v351 = vmul.f32 %v195, %v331
        %v352 = vmul.f32 %v196, %v331
        %v353 = vmul.f32 %v197, %v346
        %v354 = vmul.f32 %v198, %v346
        %355 = vst [vmem:[%s190] sm:$0xff] %v347
        %356 = vst [vmem:[%s190 + $0x8] sm:$0xff] %v348
        %357 = vst [vmem:[%s190 + $0x10] sm:$0xff] %v349
        %358 = vst [vmem:[%s190 + $0x18] sm:$0xff] %v350
        %359 = vst [vmem:[%s190 + $0x20] sm:$0xff] %v351
        %360 = vst [vmem:[%s190 + $0x28] sm:$0xff] %v352
        %361 = vst [vmem:[%s190 + $0x30] sm:$0xff] %v353
        %362 = vst [vmem:[%s190 + $0x38] sm:$0xff] %v354
        %s363 = sand.u32 %s96, 1
        %s364 = scalar_lea.sflag [#allocation4], %s363
        %s365 = sand.u32 %s96, 1
        %s366 = smul.addr %s365, 64
        %s367 = scalar_lea.vmem [#allocation5], %s366
        // Predicated region
        $region37: #{tpu_custom_call.1} parent=31 // pred_check
          %p368 = pneg %p106
        $region38: #{tpu_custom_call.1} parent=31 // pred_check_branch
          %370 = sbr.rel (%p368) target = $region40
        $region39: #{tpu_custom_call.1} parent=31 // pred_region
          %372 = vsyncadd %s364, 0
          %s373 = smul.addr %s20, 8
          %s374 = smul.addr %s373, 8
          %s375 = scalar_lea.hbm %s3, %s374
          %s376 = sshll.u32 %s367, 4
          %s377 = int_to_ptr.vmem [resolvable:$true] %s376
          %s378 = sshll.u32 %s375, 4
          %s379 = int_to_ptr.hbm [resolvable:$true] %s378
          %384 = dma.vmem_to_hbm [thread:$0]  %s377, 1024, %s379, %s364, 256, 256, 16
        $region40: #{tpu_custom_call.1} parent=31 // pred_fallthru
          _
      $region32: #{tpu_custom_call.1} parent=5 // pred_fallthru
        _
      %p385 = scmp.le.s32.totalorder 2, %s15
      // Predicated region
      $region41: #{tpu_custom_call.1} parent=5 // pred_check
        %p386 = pneg %p385
      $region42: #{tpu_custom_call.1} parent=5 // pred_check_branch
        %388 = sbr.rel (%p386) target = $region44
      $region43: #{tpu_custom_call.1} parent=5 // pred_region
        %s389 = ssub.s32 %s15, 2
        // Predicated region
        $region45: #{tpu_custom_call.1} parent=43 // pred_check
          %p390 = pneg %p112
        $region46: #{tpu_custom_call.1} parent=43 // pred_check_branch
          %392 = sbr.rel (%p390) target = $region48
        $region47: #{tpu_custom_call.1} parent=43 // pred_region
          %s393 = sand.u32 %s97, 1
          %s394 = scalar_lea.sflag [#allocation4], %s393
          %s395 = sand.u32 %s97, 1
          %s396 = smul.addr %s395, 64
          %s397 = scalar_lea.vmem [#allocation5], %s396
          %399 = dma.done %s394, 1024
        $region48: #{tpu_custom_call.1} parent=43 // pred_fallthru
          _
      $region44: #{tpu_custom_call.1} parent=5 // pred_fallthru
        _
    $region6: #{tpu_custom_call.1} parent=1 // loop_footer
      %s19 = sadd.s32 1, %s15
    $region7: #{tpu_custom_call.1} parent=1 // loop_footer_branch
      %14 = sbr.rel target = $region3
    $region8: #{tpu_custom_call.1} parent=1 // loop_exit
      _
    %400 = vsyncpa [#allocation3], 1
    %s401 = scalar_lea.sflag [#allocation3], 1
    %402 = vsyncpa %s401, 1
    %403 = vsyncpa [#allocation4], 1
    %s404 = scalar_lea.sflag [#allocation4], 1
    %405 = vsyncpa %s404, 1

</llo_original>
